<compile_context>
chip_gen: v6e
topology: v6e:2x2x1
jax: 0.10.0
libtpu: 0.0.40
codegen_flags: <defaults>
</compile_context>

<pallas_src>
import functools

import jax
import jax.numpy as jnp
from jax.experimental import pallas as pl
from jax.experimental.pallas import tpu as pltpu

_LANE = 128


def _round_up(n, m):
    return (n + m - 1) // m * m


def _is_pre_v6_tpu():
    """True on v5e and older (no bf16 VPU/EUP, single vector-store slot)."""
    try:
        kind = jax.devices()[0].device_kind.lower()
    except Exception:
        return False
    return any(t in kind for t in ("v2", "v3", "v4", "v5"))


# ---------------------------------------------------------------------------
# Parameter packing: all weights/biases -> one (H, C) buffer, lane-aligned.
# ---------------------------------------------------------------------------
def pack_params(weights, biases, param_dtype=jnp.bfloat16):
    """Pack torch-layout (out, in) weights + biases into a single 2D buffer.

    Each W_i and each bias column starts at a 128-lane-aligned column so the
    in-kernel static ref slices are aligned loads.  Returns
    (packed (H, C) array, dims, offsets) where dims[i] = (d_out_i, d_in_i) and
    offsets[i] = (w_col, b_col).
    """
    dims = tuple((int(w.shape[0]), int(w.shape[1])) for w in weights)
    H = max(d for d, _ in dims)
    offs, c = [], 0
    for d_out, d_in in dims:
        w_off = c
        c += _round_up(d_in, _LANE)
        b_off = c
        c += _LANE
        offs.append((w_off, b_off))
    packed = jnp.zeros((H, c), dtype=param_dtype)
    for (w, b), (d_out, d_in), (w_off, b_off) in zip(
            zip(weights, biases), dims, offs):
        packed = packed.at[:d_out, w_off:w_off + d_in].set(
            jnp.asarray(w, param_dtype))
        packed = packed.at[:d_out, b_off:b_off + 1].set(
            jnp.asarray(b, param_dtype).reshape(d_out, 1))
    return packed, dims, tuple(offs)


# ---------------------------------------------------------------------------
# Kernel
# ---------------------------------------------------------------------------
def _mlp_kernel(dims, offs, acts_bf16, x_ref, p_ref, out_ref):
    """Fused MLP forward for one batch tile (batch on the lane axis).

    x_ref  : (d_in0, bt)   input activations, batch along lanes (lane-dense)
    p_ref  : (H, C)        packed bf16 params, whole buffer resident in VMEM
    out_ref: (d_outL, bt)
    Hidden layers use tanh; the final layer is linear.
    """
    num_layers = len(dims)

    h = x_ref[...]
    if h.dtype != jnp.float32:
        h = h.astype(jnp.float32)

    for li, ((d_out, d_in), (w_off, b_off)) in enumerate(zip(dims, offs)):
        w = p_ref[0:d_out, w_off:w_off + d_in]                    # (d_out, d_in) bf16
        b = p_ref[0:d_out, b_off:b_off + 1].astype(jnp.float32)   # (d_out, 1)

        if d_in <= 4:
            # Tiny contraction (e.g. 2 PINN coords): unrolled VPU broadcast-FMA,
            # skip the MXU push/pop round trip.
            wf = w.astype(jnp.float32)
            hf = h.astype(jnp.float32)
            acc = wf[:, 0:1] * hf[0:1, :]
            for k in range(1, d_in):
                acc = acc + wf[:, k:k + 1] * hf[k:k + 1, :]
            h_new = acc + b
        elif d_out == 1:
            # Width-1 output head: VPU mul + sublane (XLU) reduce in f32.
            h_new = jnp.sum(w.astype(jnp.float32).T * h.astype(jnp.float32),
                            axis=0, keepdims=True) + b
        else:
            # Real hidden matmul on the MXU: bf16 operands, f32 accumulation.
            h_new = jnp.dot(w, h.astype(jnp.bfloat16),
                            preferred_element_type=jnp.float32) + b

        if li < num_layers - 1:
            # bf16 tanh on v6e/v7x (bf16 EUP ~2x; result feeds the next bf16
            # MXU dot directly); f32 tanh on v5e and older.
            if acts_bf16:
                h = jnp.tanh(h_new.astype(jnp.bfloat16))
            else:
                h = jnp.tanh(h_new)
        else:
            h = h_new

    out_ref[...] = h.astype(out_ref.dtype)


# ---------------------------------------------------------------------------
# Tiling: large 128-aligned lane tiles, small even grid.
# ---------------------------------------------------------------------------
def _choose_tiling(n, batch_tile, max_tile):
    n128 = _round_up(max(n, 1), _LANE)
    if batch_tile is not None:
        bt = _round_up(max(_LANE, min(batch_tile, n128)), _LANE)
        steps = -(-n128 // bt)
    else:
        steps = -(-n128 // max_tile)
        if n128 > _LANE:
            steps = max(steps, 2)          # keep both v7x TensorCores busy
        bt = None
    if steps > 1 and steps % 2:
        steps += 1                          # even grid -> no idle TC on the tail
    if bt is None:
        bt = _round_up(-(-n128 // steps), _LANE)
    n_pad = steps * bt
    return bt, n_pad, steps


# ---------------------------------------------------------------------------
# Wrapper
# ---------------------------------------------------------------------------
def net_dense_forward(x, weights, biases, *, batch_tile=None,
                      acts_bf16=None, param_dtype=jnp.bfloat16):
    """Run the fused Net_dense forward as a single Pallas TPU kernel.

    x:       (N, layers[0]) array.
    weights: list of (out_features, in_features) arrays (torch Linear layout).
    biases:  list of (out_features,) arrays.
    Returns (N, layers[-1]) float32.

    In a training loop, pack_params() and the x.T / zero-pad below should be
    hoisted and cached (collocation points are usually fixed); here they are
    jit-fused with the pallas_call by the caller.
    """
    x = jnp.asarray(x)
    N, d_in = x.shape

    pre_v6 = _is_pre_v6_tpu()
    if acts_bf16 is None:
        acts_bf16 = not pre_v6
    # v5e: cap the tile so the live (32, bt) f32 activation stays ~32 vregs.
    max_tile = 1024 if pre_v6 else 8192

    packed, dims, offs = pack_params(weights, biases, param_dtype)
    d_out = dims[-1][0]

    bt, n_pad, steps = _choose_tiling(N, batch_tile, max_tile)

    # Batch on the lane (last) axis -> lane-dense activations & output stores.
    x_t = x.T
    if n_pad != N:
        x_t = jnp.pad(x_t, ((0, 0), (0, n_pad - N)))

    # Advisory cost estimate so XLA schedules this call sensibly among the
    # surrounding PINN ops (residual / autodiff terms).
    flops = int(2 * n_pad * sum(o * i for o, i in dims))
    transcendentals = int(n_pad * sum(o for o, _ in dims[:-1]))
    bytes_accessed = int(x_t.size * x_t.dtype.itemsize
                         + n_pad * d_out * 4
                         + packed.size * packed.dtype.itemsize)

    kernel = functools.partial(_mlp_kernel, dims, offs, acts_bf16)

    out_t = pl.pallas_call(
        kernel,
        out_shape=jax.ShapeDtypeStruct((d_out, n_pad), jnp.float32),
        grid_spec=pltpu.PrefetchScalarGridSpec(
            num_scalar_prefetch=0,
            grid=(steps,),
            in_specs=[
                pl.BlockSpec((d_in, bt), lambda i: (0, i)),     # x batch tile
                pl.BlockSpec(packed.shape, lambda i: (0, 0)),   # packed params, resident
            ],
            out_specs=pl.BlockSpec((d_out, bt), lambda i: (0, i)),
        ),
        compiler_params=pltpu.CompilerParams(
            dimension_semantics=("parallel",),
        ),
        cost_estimate=pl.CostEstimate(
            flops=flops,
            transcendentals=transcendentals,
            bytes_accessed=bytes_accessed,
        ),
    )(x_t, packed)

    # (d_out, n_pad) -> (N, d_out); padded columns sliced off.
    return out_t[:, :N].T


# ---------------------------------------------------------------------------
# Reference / init / demo
# ---------------------------------------------------------------------------
def init_params(layers, key):
    """PyTorch-Linear-style init: U(-1/sqrt(fan_in), 1/sqrt(fan_in)), torch layout."""
    weights, biases = [], []
    for i in range(len(layers) - 1):
        fan_in, fan_out = layers[i], layers[i + 1]
        key, kw, kb = jax.random.split(key, 3)
        bound = 1.0 / (fan_in ** 0.5)
        w = jax.random.uniform(kw, (fan_out, fan_in), jnp.float32, -bound, bound)
        b = jax.random.uniform(kb, (fan_out,), jnp.float32, -bound, bound)
        weights.append(w)
        biases.append(b)
    return weights, biases


def reference_forward(x, weights, biases):
    """Plain-JAX reference (torch semantics: x @ W.T + b, tanh on hidden layers)."""
    h = x
    for li, (w, b) in enumerate(zip(weights, biases)):
        h = jnp.dot(h, w.T, precision=jax.lax.Precision.HIGHEST) + b
        if li < len(weights) - 1:
            h = jnp.tanh(h)
    return h


if __name__ == "__main__":
    # Typical PINN dense net: 2 inputs (x, t), hidden width 32, 1 output.
    layers = [2, 32, 32, 1]
    N = 512  # small demo; real PINN batches (1e5-1e6 points) use bt up to 8192

    key = jax.random.PRNGKey(0)
    key, kx = jax.random.split(key)
    x = jax.random.normal(kx, (N, layers[0]), dtype=jnp.float32)
    weights, biases = init_params(layers, key)

    # Jit the wrapper so the x.T transpose / pad / output slice fuse with the
    # pallas_call instead of being separate HBM round trips.
    fwd = jax.jit(lambda xv: net_dense_forward(xv, weights, biases))
    y = jax.block_until_ready(fwd(x))

    y_ref = reference_forward(x, weights, biases)
    assert y.shape == (N, layers[-1])
    # bf16 MXU operands / bf16 tanh -> looser tolerance than a pure-f32 check.
    assert jnp.allclose(y, y_ref, atol=5e-2, rtol=5e-2), "mismatch vs reference"

    print("KERNEL_OK")
</pallas_src>

<mosaic_0001>
module attributes {stable_mosaic.version = 11 : i64} {
  func.func @_mlp_kernel(%arg0: i32, %arg1: memref<2x256xf32, #tpu.memory_space<vmem>>, %arg2: memref<32x768xbf16, #tpu.memory_space<vmem>>, %arg3: memref<1x256xf32, #tpu.memory_space<vmem>>) attributes {dimension_semantics = [#tpu.dimension_semantics<parallel>], iteration_bounds = array<i64: 2>, scalar_prefetch = 0 : i64, scratch_operands = 0 : i64, tpu.core_type = #tpu.core_type<tc>, window_params = [{transform_indices = @transform_0, window_bounds = array<i64: 2, 256>}, {pipeline_mode = #tpu.pipeline_mode<synchronous>, transform_indices = @transform_1, window_bounds = array<i64: 32, 768>}, {transform_indices = @transform_2, window_bounds = array<i64: 1, 256>}]} {
    %c0 = arith.constant 0 : index
    %c0_0 = arith.constant 0 : index
    %0 = vector.load %arg1[%c0, %c0_0] : memref<2x256xf32, #tpu.memory_space<vmem>>, vector<2x256xf32>
    %c0_1 = arith.constant 0 : index
    %c0_2 = arith.constant 0 : index
    %1 = vector.load %arg2[%c0_1, %c0_2] : memref<32x768xbf16, #tpu.memory_space<vmem>>, vector<32x2xbf16>
    %c0_3 = arith.constant 0 : index
    %c128 = arith.constant 128 : index
    %2 = vector.load %arg2[%c0_3, %c128] : memref<32x768xbf16, #tpu.memory_space<vmem>>, vector<32x1xbf16>
    %3 = arith.extf %2 : vector<32x1xbf16> to vector<32x1xf32>
    %4 = arith.extf %1 : vector<32x2xbf16> to vector<32x2xf32>
    %5 = vector.extract_strided_slice %4 {offsets = [0, 0], sizes = [32, 1], strides = [1, 1]} : vector<32x2xf32> to vector<32x1xf32>
    %6 = vector.extract_strided_slice %0 {offsets = [0, 0], sizes = [1, 256], strides = [1, 1]} : vector<2x256xf32> to vector<1x256xf32>
    %7 = vector.broadcast %5 : vector<32x1xf32> to vector<32x256xf32>
    %8 = vector.broadcast %6 : vector<1x256xf32> to vector<32x256xf32>
    %9 = arith.mulf %7, %8 : vector<32x256xf32>
    %10 = vector.extract_strided_slice %4 {offsets = [0, 1], sizes = [32, 1], strides = [1, 1]} : vector<32x2xf32> to vector<32x1xf32>
    %11 = vector.extract_strided_slice %0 {offsets = [1, 0], sizes = [1, 256], strides = [1, 1]} : vector<2x256xf32> to vector<1x256xf32>
    %12 = vector.broadcast %10 : vector<32x1xf32> to vector<32x256xf32>
    %13 = vector.broadcast %11 : vector<1x256xf32> to vector<32x256xf32>
    %14 = arith.mulf %12, %13 : vector<32x256xf32>
    %15 = arith.addf %9, %14 : vector<32x256xf32>
    %16 = vector.broadcast %3 : vector<32x1xf32> to vector<32x256xf32>
    %17 = arith.addf %15, %16 : vector<32x256xf32>
    %18 = arith.truncf %17 : vector<32x256xf32> to vector<32x256xbf16>
    %19 = math.tanh %18 : vector<32x256xbf16>
    %c0_4 = arith.constant 0 : index
    %c256 = arith.constant 256 : index
    %20 = vector.load %arg2[%c0_4, %c256] : memref<32x768xbf16, #tpu.memory_space<vmem>>, vector<32x32xbf16>
    %c0_5 = arith.constant 0 : index
    %c384 = arith.constant 384 : index
    %21 = vector.load %arg2[%c0_5, %c384] : memref<32x768xbf16, #tpu.memory_space<vmem>>, vector<32x1xbf16>
    %22 = arith.extf %21 : vector<32x1xbf16> to vector<32x1xf32>
    %cst = arith.constant dense<0.000000e+00> : vector<32x256xf32>
    %23 = tpu.matmul %20, %19, %cst {dimension_numbers = #tpu.dot_dimension_numbers<[1], [0], [0], [1], [0, 0, 1, 1], [], []>} : vector<32x32xbf16>, vector<32x256xbf16>, vector<32x256xf32> -> vector<32x256xf32>
    %24 = vector.broadcast %22 : vector<32x1xf32> to vector<32x256xf32>
    %25 = arith.addf %23, %24 : vector<32x256xf32>
    %26 = arith.truncf %25 : vector<32x256xf32> to vector<32x256xbf16>
    %27 = math.tanh %26 : vector<32x256xbf16>
    %c0_6 = arith.constant 0 : index
    %c512 = arith.constant 512 : index
    %28 = vector.load %arg2[%c0_6, %c512] : memref<32x768xbf16, #tpu.memory_space<vmem>>, vector<1x32xbf16>
    %c0_7 = arith.constant 0 : index
    %c640 = arith.constant 640 : index
    %29 = vector.load %arg2[%c0_7, %c640] : memref<32x768xbf16, #tpu.memory_space<vmem>>, vector<1x1xbf16>
    %30 = arith.extf %29 : vector<1x1xbf16> to vector<1x1xf32>
    %31 = arith.extf %28 : vector<1x32xbf16> to vector<1x32xf32>
    %32 = tpu.transpose %31, [1, 0] : vector<1x32xf32> -> vector<32x1xf32>
    %33 = arith.extf %27 : vector<32x256xbf16> to vector<32x256xf32>
    %34 = vector.broadcast %32 : vector<32x1xf32> to vector<32x256xf32>
    %35 = arith.mulf %34, %33 : vector<32x256xf32>
    %cst_8 = arith.constant dense<0.000000e+00> : vector<256xf32>
    %36 = vector.multi_reduction <add>, %35, %cst_8 [0] : vector<32x256xf32> to vector<256xf32>
    %37 = vector.shape_cast %36 : vector<256xf32> to vector<1x256xf32>
    %38 = vector.broadcast %30 : vector<1x1xf32> to vector<1x256xf32>
    %39 = arith.addf %37, %38 : vector<1x256xf32>
    %c0_9 = arith.constant 0 : index
    %c0_10 = arith.constant 0 : index
    %40 = vector.load %arg3[%c0_9, %c0_10] : memref<1x256xf32, #tpu.memory_space<vmem>>, vector<1x256xf32>
    tpu.vector_store %arg3[%c0_9, %c0_10], %39 {strides = array<i32>} : memref<1x256xf32, #tpu.memory_space<vmem>>, vector<1x256xf32>,
    return
  }
  func.func @transform_0(%arg0: i32) -> (i32, i32) {
    %c0_i32 = arith.constant 0 : i32
    %c0_i32_0 = arith.constant 0 : i32
    return %c0_i32, %arg0 : i32, i32
  }
  func.func @transform_1(%arg0: i32) -> (i32, i32) {
    %c0_i32 = arith.constant 0 : i32
    %c0_i32_0 = arith.constant 0 : i32
    %c0_i32_1 = arith.constant 0 : i32
    return %c0_i32, %c0_i32_0 : i32, i32
  }
  func.func @transform_2(%arg0: i32) -> (i32, i32) {
    %c0_i32 = arith.constant 0 : i32
    %c0_i32_0 = arith.constant 0 : i32
    return %c0_i32, %arg0 : i32, i32
  }
}

</mosaic_0001>

<llo_original>
// kernel: _lambda_.1
$region0: #{_lambda_.1}
  #allocation0 [shape = 'u32[]', space=smem, size = 0x4, offset = 0x4, fixed_abs, tag = 'smem constant byte address 0x4 - core index']
  #allocation1 [shape = 'u32[144,128]{1,0:T(1,128)}', space=vmem, size = 0x12000, scoped, tag = 'internal scratch']
  %s0 = inlined_call_operand.vmem [shape: f32[2,512], index: 0, kind: input, shape index: {}]
  %s1 = inlined_call_operand.vmem [shape: bf16[32,768], index: 1, kind: input, shape index: {}]
  %s2 = inlined_call_operand.hbm [shape: f32[1,512], index: 2, kind: output, shape index: {}]
  %s3 = sld [smem:[#allocation0]]
  $region41: #{_lambda_.1} parent=0
    _
  %s5 = ssub.s32 1, %s3
  %s6 = scalar_select 0, %s5, %s3
  $region1: #{_lambda_.1} parent=0
    #allocation2 [shape = 'u8[2048]{0}', space=vmem, size = 0x800, scoped, tag = 'output window, operand 0']
    #allocation3 [shape = 's32[2]{0}', space=sflag, size = 0x8, scoped, tag = 'scoped memory for _lambda_.1']
    %7 = vsyncpa [#allocation3], 0
    %s8 = scalar_lea.sflag [#allocation3], 1
    %9 = vsyncpa %s8, 0
    loop: start=0, step=1, limit=4
    $region2: #{_lambda_.1} parent=1 // loop_pre_header
      _
    $region3: #{_lambda_.1} parent=1 // loop_header
      %s11 = sphi 0, %s15
      %p12 = scmp.ge.s32.totalorder %s11, 4
      %s21 = sphi 0, %s23
      %s24 = sphi 0, %s21
      %s25 = sphi 0, %s24
      %s41 = sphi 0, %s25
      %s45 = sphi 0, %s45
      %s47 = sphi 0, %s45
      %s48 = sphi 0, %s47
      %s62 = sphi 0, %s48
      %s68 = sphi 0, %s70
      %s71 = sphi 0, %s68
      %s72 = sphi 0, %s71
      %s88 = sphi 0, %s72
    $region4: #{_lambda_.1} parent=1 // loop_header_branch
      %14 = sbr.rel (%p12) target = $region8
    $region5: #{_lambda_.1} parent=1 // loop_body
      %s16 = ssub.s32 %s11, 1
      %s17 = ssub.s32 %s11, 2
      %s18 = sadd.s32 %s11, 1
      %s19 = ssub.s32 %s11, %s18
      %p20 = scmp.eq.s32.totalorder %s19, 0
      %s22 = sadd.s32 %s21, 1
      %s23 = scalar_select %p20, %s21, %s22
      %p26 = pneg %p20
      %p27 = scmp.eq.s32.totalorder %s11, 1
      %p28 = por %p26, %p27
      %p29 = scmp.ne.s32.totalorder %s21, %s24
      %p30 = scmp.eq.s32.totalorder %s11, 0
      %p31 = por %p29, %p30
      %p32 = scmp.ne.s32.totalorder %s21, %s24
      %p33 = scmp.eq.s32.totalorder %s16, 1
      %p34 = por %p32, %p33
      %p35 = scmp.ne.s32.totalorder %s24, %s25
      %p36 = scmp.eq.s32.totalorder %s16, 0
      %p37 = por %p35, %p36
      %p38 = scmp.ne.s32.totalorder %s24, %s25
      %p39 = scmp.eq.s32.totalorder %s17, 1
      %p40 = por %p38, %p39
      %p42 = scmp.ne.s32.totalorder %s25, %s41
      %p43 = scmp.eq.s32.totalorder %s17, 0
      %p44 = por %p42, %p43
      %s46 = sadd.s32 %s45, 1
      %p49 = scmp.eq.s32.totalorder %s11, 1
      %p50 = scmp.ne.s32.totalorder %s45, %s47
      %p51 = scmp.eq.s32.totalorder %s11, 0
      %p52 = por %p50, %p51
      %p53 = scmp.ne.s32.totalorder %s45, %s47
      %p54 = scmp.eq.s32.totalorder %s16, 1
      %p55 = por %p53, %p54
      %p56 = scmp.ne.s32.totalorder %s47, %s48
      %p57 = scmp.eq.s32.totalorder %s16, 0
      %p58 = por %p56, %p57
      %p59 = scmp.ne.s32.totalorder %s47, %s48
      %p60 = scmp.eq.s32.totalorder %s17, 1
      %p61 = por %p59, %p60
      %p63 = scmp.ne.s32.totalorder %s48, %s62
      %p64 = scmp.eq.s32.totalorder %s17, 0
      %p65 = por %p63, %p64
      %s66 = ssub.s32 %s11, %s18
      %p67 = scmp.eq.s32.totalorder %s66, 0
      %s69 = sadd.s32 %s68, 1
      %s70 = scalar_select %p67, %s68, %s69
      %p73 = pneg %p67
      %p74 = scmp.eq.s32.totalorder %s11, 1
      %p75 = por %p73, %p74
      %p76 = scmp.ne.s32.totalorder %s68, %s71
      %p77 = scmp.eq.s32.totalorder %s11, 0
      %p78 = por %p76, %p77
      %p79 = scmp.ne.s32.totalorder %s68, %s71
      %p80 = scmp.eq.s32.totalorder %s16, 1
      %p81 = por %p79, %p80
      %p82 = scmp.ne.s32.totalorder %s71, %s72
      %p83 = scmp.eq.s32.totalorder %s16, 0
      %p84 = por %p82, %p83
      %p85 = scmp.ne.s32.totalorder %s71, %s72
      %p86 = scmp.eq.s32.totalorder %s17, 1
      %p87 = por %p85, %p86
      %p89 = scmp.ne.s32.totalorder %s72, %s88
      %p90 = scmp.eq.s32.totalorder %s17, 0
      %p91 = por %p89, %p90
      %p92 = scmp.le.s32.totalorder 1, %s11
      %p93 = scmp.lt.s32.totalorder %s11, 3
      %p94 = pnand %p92, %p93
      %p95 = pneg %p94
      // Predicated region
      $region9: #{_lambda_.1} parent=5 // pred_check
        _
      $region10: #{_lambda_.1} parent=5 // pred_check_branch
        %97 = sbr.rel (%p94) target = $region12
      $region11: #{_lambda_.1} parent=5 // pred_region
        %s98 = ssub.s32 %s11, 1
        // Predicated region
        $region13: #{_lambda_.1} parent=11 // pred_check
          %p99 = pneg %p58
        $region14: #{_lambda_.1} parent=11 // pred_check_branch
          %101 = sbr.rel (%p99) target = $region16
        $region15: #{_lambda_.1} parent=11 // pred_region
          _
        $region16: #{_lambda_.1} parent=11 // pred_fallthru
          _
      $region12: #{_lambda_.1} parent=5 // pred_fallthru
        _
      %p102 = scmp.lt.s32.totalorder %s11, 2
      // Predicated region
      $region17: #{_lambda_.1} parent=5 // pred_check
        %p103 = pneg %p102
      $region18: #{_lambda_.1} parent=5 // pred_check_branch
        %105 = sbr.rel (%p103) target = $region20
      $region19: #{_lambda_.1} parent=5 // pred_region
        // Predicated region
        $region21: #{_lambda_.1} parent=19 // pred_check
          %p106 = pneg %p31
        $region22: #{_lambda_.1} parent=19 // pred_check_branch
          %108 = sbr.rel (%p106) target = $region24
        $region23: #{_lambda_.1} parent=19 // pred_region
          %s109 = smul.u32 2, %s11
          %p110 = scmp.lt.s32.totalorder %s109, 3
          %s111 = scalar_select %p110, %s109, 3
          %s112 = smul.addr %s111, 2
          %s113 = scalar_lea.vmem %s0, %s112
          %s114 = smul.u32 2, %s11
        $region24: #{_lambda_.1} parent=19 // pred_fallthru
          _
      $region20: #{_lambda_.1} parent=5 // pred_fallthru
        _
      %p115 = scmp.le.s32.totalorder 1, %s11
      %p116 = scmp.lt.s32.totalorder %s11, 3
      %p117 = pnand %p115, %p116
      %p118 = pneg %p117
      // Predicated region
      $region25: #{_lambda_.1} parent=5 // pred_check
        _
      $region26: #{_lambda_.1} parent=5 // pred_check_branch
        %120 = sbr.rel (%p117) target = $region28
      $region27: #{_lambda_.1} parent=5 // pred_region
        %s121 = ssub.s32 %s11, 1
        %s122 = smul.u32 2, %s16
        %p123 = scmp.lt.s32.totalorder %s122, 3
        %s124 = scalar_select %p123, %s122, 3
        %s125 = smul.addr %s124, 2
        %s126 = scalar_lea.vmem %s0, %s125
        %p127 = pneg %p37
        %p128 = pneg %p34
        %p129 = pneg %p58
        %p130 = pneg %p55
        %p131 = pneg %p84
        %p132 = pneg %p81
        %s133 = sand.u32 %s71, 1
        %s134 = scalar_lea.sflag [#allocation3], %s133
        %s135 = sand.u32 %s71, 1
        %s136 = smul.addr %s135, 2
        %s137 = scalar_lea.vmem [#allocation2], %s136
        %s138 = smul.u32 2, %s16
        %p139 = scmp.lt.s32.totalorder %s138, 3
        %s140 = scalar_select %p139, %s138, 3
        %s141 = smul.addr %s140, 2
        %s142 = scalar_lea.vmem %s0, %s141
        %s143 = smul.u32 2, %s16
        %s144 = smul.u32 2, %s16
        %v146 = vld [vmem:[%s142] sm:$0xf]
        %v147 = vld [vmem:[%s1] sm:$0xf]
        %v148 = vld [vmem:[%s1 + $0x18] sm:$0xf]
        %v149 = vld [vmem:[%s1 + $0x30] sm:$0xf]
        %v150 = vld [vmem:[%s1 + $0x48] sm:$0xf]
        %v151 = vld [vmem:[%s1 + $0x4] sm:$0xf]
        %v152 = vld [vmem:[%s1 + $0x1c] sm:$0xf]
        %v153 = vld [vmem:[%s1 + $0x34] sm:$0xf]
        %v154 = vld [vmem:[%s1 + $0x4c] sm:$0xf]
        %v155 = vunpack.c.l.bf16 %v151
        %v156 = vunpack.c.l.bf16 %v152
        %v157 = vunpack.c.l.bf16 %v153
        %v158 = vunpack.c.l.bf16 %v154
        %v159 = vunpack.c.l.bf16 %v147
        %v160 = vunpack.c.l.bf16 %v148
        %v161 = vunpack.c.l.bf16 %v149
        %v162 = vunpack.c.l.bf16 %v150
        %164 = vset.pattern.permute.xlu0 0
        %165 = vperm.xlu0 %164, %v159
        %v166 = vpop.permute.xlu0 %165
        %169 = vset.pattern.permute.xlu0 0
        %170 = vperm.xlu0 %169, %v160
        %v171 = vpop.permute.xlu0 %170
        %174 = vset.pattern.permute.xlu0 0
        %175 = vperm.xlu0 %174, %v161
        %v176 = vpop.permute.xlu0 %175
        %179 = vset.pattern.permute.xlu0 0
        %180 = vperm.xlu0 %179, %v162
        %v181 = vpop.permute.xlu0 %180
        %v184 = vlaneseq
        %v185 = vshrl.u32 %v184, 7
        %v186 = vsub.s32 0, %v185
        %v187 = vrot.slane %v146, %v186
        %v188 = vlaneseq
        %v189 = vshrl.u32 %v188, 7
        %v190 = vsub.s32 2, %v189
        %v191 = vrot.slane %v146, %v190
        %v194 = vlaneseq
        %v195 = vshrl.u32 %v194, 7
        %v196 = vsub.s32 0, %v195
        %v197 = vrot.slane %v187, %v196
        %v198 = vlaneseq
        %v199 = vshrl.u32 %v198, 7
        %v200 = vsub.s32 0, %v199
        %v201 = vrot.slane %v191, %v200
        %v202 = vmul.f32 %v166, %v197
        %v203 = vmul.f32 %v166, %v201
        %v204 = vmul.f32 %v171, %v197
        %v205 = vmul.f32 %v171, %v201
        %v206 = vmul.f32 %v176, %v197
        %v207 = vmul.f32 %v176, %v201
        %v208 = vmul.f32 %v181, %v197
        %v209 = vmul.f32 %v181, %v201
        %210 = vset.pattern.permute.xlu0 1
        %211 = vperm.xlu0 %210, %v159
        %v212 = vpop.permute.xlu0 %211
        %214 = vset.pattern.permute.xlu0 1
        %215 = vperm.xlu0 %214, %v160
        %v216 = vpop.permute.xlu0 %215
        %218 = vset.pattern.permute.xlu0 1
        %219 = vperm.xlu0 %218, %v161
        %v220 = vpop.permute.xlu0 %219
        %222 = vset.pattern.permute.xlu0 1
        %223 = vperm.xlu0 %222, %v162
        %v224 = vpop.permute.xlu0 %223
        %v226 = vlaneseq
        %v227 = vshrl.u32 %v226, 7
        %v228 = vsub.s32 1, %v227
        %v229 = vrot.slane %v146, %v228
        %v230 = vlaneseq
        %v231 = vshrl.u32 %v230, 7
        %v232 = vsub.s32 3, %v231
        %v233 = vrot.slane %v146, %v232
        %v236 = vlaneseq
        %v237 = vshrl.u32 %v236, 7
        %v238 = vsub.s32 1, %v237
        %v239 = vrot.slane %v229, %v238
        %v240 = vlaneseq
        %v241 = vshrl.u32 %v240, 7
        %v242 = vsub.s32 1, %v241
        %v243 = vrot.slane %v233, %v242
        %v244 = vmul.f32 %v212, %v239
        %v245 = vmul.f32 %v212, %v243
        %v246 = vmul.f32 %v216, %v239
        %v247 = vmul.f32 %v216, %v243
        %v248 = vmul.f32 %v220, %v239
        %v249 = vmul.f32 %v220, %v243
        %v250 = vmul.f32 %v224, %v239
        %v251 = vmul.f32 %v224, %v243
        %v252 = vadd.f32 %v202, %v244
        %v253 = vadd.f32 %v203, %v245
        %v254 = vadd.f32 %v204, %v246
        %v255 = vadd.f32 %v205, %v247
        %v256 = vadd.f32 %v206, %v248
        %v257 = vadd.f32 %v207, %v249
        %v258 = vadd.f32 %v208, %v250
        %v259 = vadd.f32 %v209, %v251
        %261 = vset.pattern.permute.xlu0 0
        %262 = vperm.xlu0 %261, %v155
        %v263 = vpop.permute.xlu0 %262
        %266 = vset.pattern.permute.xlu0 0
        %267 = vperm.xlu0 %266, %v156
        %v268 = vpop.permute.xlu0 %267
        %271 = vset.pattern.permute.xlu0 0
        %272 = vperm.xlu0 %271, %v157
        %v273 = vpop.permute.xlu0 %272
        %276 = vset.pattern.permute.xlu0 0
        %277 = vperm.xlu0 %276, %v158
        %v278 = vpop.permute.xlu0 %277
        %v280 = vadd.f32 %v252, %v263
        %v281 = vadd.f32 %v253, %v263
        %v282 = vadd.f32 %v254, %v268
        %v283 = vadd.f32 %v255, %v268
        %v284 = vadd.f32 %v256, %v273
        %v285 = vadd.f32 %v257, %v273
        %v286 = vadd.f32 %v258, %v278
        %v287 = vadd.f32 %v259, %v278
        %v288 = vpack.c.bf16 %v282, %v280
        %v289 = vpack.c.bf16 %v283, %v281
        %v290 = vpack.c.bf16 %v286, %v284
        %v291 = vpack.c.bf16 %v287, %v285
        %v292 = vtanh.bf16.pop %v288
        %v293 = vtanh.bf16.pop %v289
        %v294 = vtanh.bf16.pop %v290
        %v295 = vtanh.bf16.pop %v291
        %v296 = vld [vmem:[%s1 + $0x8] sm:$0xf]
        %v297 = vld [vmem:[%s1 + $0x20] sm:$0xf]
        %v298 = vld [vmem:[%s1 + $0x38] sm:$0xf]
        %v299 = vld [vmem:[%s1 + $0x50] sm:$0xf]
        %v300 = vld [vmem:[%s1 + $0xc] sm:$0xf]
        %v301 = vld [vmem:[%s1 + $0x24] sm:$0xf]
        %v302 = vld [vmem:[%s1 + $0x3c] sm:$0xf]
        %v303 = vld [vmem:[%s1 + $0x54] sm:$0xf]
        %v304 = vunpack.c.l.bf16 %v300
        %v305 = vunpack.c.l.bf16 %v301
        %v306 = vunpack.c.l.bf16 %v302
        %v307 = vunpack.c.l.bf16 %v303
        %309 = vset.pattern.permute.xlu0 0
        %310 = vperm.xlu0 %309, %v304
        %v311 = vpop.permute.xlu0 %310
        %314 = vset.pattern.permute.xlu0 0
        %315 = vperm.xlu0 %314, %v305
        %v316 = vpop.permute.xlu0 %315
        %319 = vset.pattern.permute.xlu0 0
        %320 = vperm.xlu0 %319, %v306
        %v321 = vpop.permute.xlu0 %320
        %324 = vset.pattern.permute.xlu0 0
        %325 = vperm.xlu0 %324, %v307
        %v326 = vpop.permute.xlu0 %325
        %v332 = vunpack.c.l.b16 %v296
        %v333 = vunpack.c.l.b16 %v297
        %v334 = vunpack.c.l.b16 %v298
        %v335 = vunpack.c.l.b16 %v299
        %v336 = vpack.c.b16 %v333, %v332
        %v337 = vpack.c.b16 %v335, %v334
        %vm338 = vcmask 261120
        %v340 = vsel %vm338, %v336, 0
        %v343 = vsel %vm338, %v337, 0
        %345 = vmatprep.subr.bf16.mxu0 0
        %346 = vmatpush1.bf16.msra.mxu0 0
        %347 = vmatprep.subr.bf16.mxu0 0
        %348 = vmatpush1.bf16.msra.mxu0 0
        %349 = vmatprep.subr.bf16.mxu0 0
        %350 = vmatpush1.bf16.msra.mxu0 0
        %351 = vmatprep.subr.bf16.mxu0 0
        %352 = vmatpush1.bf16.msra.mxu0 0
        %353 = vmatprep.subr.bf16.mxu0 0
        %354 = vmatpush1.bf16.msra.mxu0 0
        %355 = vmatprep.subr.bf16.mxu0 0
        %356 = vmatpush1.bf16.msra.mxu0 0
        %357 = vmatprep.subr.bf16.mxu0 %v295
        %358 = vmatpush1.bf16.msra.mxu0 %v294
        %359 = vmatprep.subr.bf16.mxu0 %v293
        %360 = vmatpush1.bf16.msra.mxu0 %v292
        %361 = vmatprep.subr.bf16.mxu0 0
        %362 = vmatpush2.bf16.msra.mxu0 0
        %363 = vmatprep.subr.bf16.mxu0 0
        %364 = vmatpush2.bf16.msra.mxu0 0
        %365 = vmatprep.subr.bf16.mxu0 0
        %366 = vmatpush2.bf16.msra.mxu0 0
        %367 = vmatprep.subr.bf16.mxu0 0
        %368 = vmatpush2.bf16.msra.mxu0 0
        %369 = vmatprep.subr.bf16.mxu0 0
        %370 = vmatpush2.bf16.msra.mxu0 0
        %371 = vmatprep.subr.bf16.mxu0 0
        %372 = vmatpush2.bf16.msra.mxu0 0
        %373 = vmatprep.subr.bf16.mxu0 0
        %374 = vmatpush2.bf16.msra.mxu0 0
        %375 = vmatprep.subr.bf16.mxu0 0
        %376 = vmatpush2.bf16.msra.mxu0 0
        %377 = vmatprep.mubr.bf16.mxu0 0
        %378 = vmatmul.mubr.bf16.gmra.mxu0 %v340
        %v379 = vpop.f32.mrf.mxu0
        %v380 = vadd.f32 %v311, %v379
        %v381 = vpop.f32.mrf.mxu0
        %v382 = vadd.f32 %v311, %v381
        %v383 = vpop.f32.mrf.mxu0
        %v384 = vadd.f32 %v316, %v383
        %v385 = vpop.f32.mrf.mxu0
        %v386 = vadd.f32 %v316, %v385
        %387 = vmatprep.mubr.bf16.mxu0 0
        %388 = vmatmul.mubr.bf16.gmra.mxu0 %v343
        %v389 = vpop.f32.mrf.mxu0
        %v390 = vadd.f32 %v321, %v389
        %v391 = vpop.f32.mrf.mxu0
        %v392 = vadd.f32 %v321, %v391
        %v393 = vpop.f32.mrf.mxu0
        %v394 = vadd.f32 %v326, %v393
        %v395 = vpop.f32.mrf.mxu0
        %v396 = vadd.f32 %v326, %v395
        %397 = vdwg.mxu0
        %v398 = vpack.c.bf16 %v384, %v380
        %v399 = vpack.c.bf16 %v386, %v382
        %v400 = vpack.c.bf16 %v394, %v390
        %v401 = vpack.c.bf16 %v396, %v392
        %v402 = vtanh.bf16.pop %v398
        %v403 = vtanh.bf16.pop %v399
        %v404 = vtanh.bf16.pop %v400
        %v405 = vtanh.bf16.pop %v401
        %v406 = vld [vmem:[%s1 + $0x10] sm:$0x1]
        %v407 = vld [vmem:[%s1 + $0x14] sm:$0x1]
        %v408 = vunpack.c.l.bf16 %v407
        %v409 = vunpack.c.l.bf16 %v406
        %410 = vxpose.xlu0.b32.start [1/16] %v409, 128
        %411 = vxpose.xlu0.b32.cont [2/16] 0.0, 128
        %412 = vxpose.xlu0.b32.cont [3/16] 0.0, 128
        %413 = vxpose.xlu0.b32.cont [4/16] 0.0, 128
        %414 = vxpose.xlu0.b32.cont [5/16] 0.0, 128
        %415 = vxpose.xlu0.b32.cont [6/16] 0.0, 128
        %416 = vxpose.xlu0.b32.cont [7/16] 0.0, 128
        %417 = vxpose.xlu0.b32.cont [8/16] 0.0, 128
        %418 = vxpose.xlu0.b32.cont [9/16] 0.0, 128
        %419 = vxpose.xlu0.b32.cont [10/16] 0.0, 128
        %420 = vxpose.xlu0.b32.cont [11/16] 0.0, 128
        %421 = vxpose.xlu0.b32.cont [12/16] 0.0, 128
        %422 = vxpose.xlu0.b32.cont [13/16] 0.0, 128
        %423 = vxpose.xlu0.b32.cont [14/16] 0.0, 128
        %424 = vxpose.xlu0.b32.cont [15/16] 0.0, 128
        %425 = vxpose.xlu0.b32.end [16/16] 0.0, 128
        %v426 = vpop.trf.xlu0
        %v427 = vpop.trf.xlu0
        %v428 = vpop.trf.xlu0
        %v429 = vpop.trf.xlu0
        %v430 = vpop.trf.xlu0
        %v431 = vpop.trf.xlu0
        %v432 = vpop.trf.xlu0
        %v433 = vpop.trf.xlu0
        %v434 = vpop.trf.xlu0
        %v435 = vpop.trf.xlu0
        %v436 = vpop.trf.xlu0
        %v437 = vpop.trf.xlu0
        %v438 = vpop.trf.xlu0
        %v439 = vpop.trf.xlu0
        %v440 = vpop.trf.xlu0
        %v441 = vpop.trf.xlu0
        %v442 = vunpack.c.l.bf16 %v402
        %v443 = vunpack.c.l.bf16 %v403
        %v444 = vunpack.c.h.bf16 %v402
        %v445 = vunpack.c.h.bf16 %v403
        %v446 = vunpack.c.l.bf16 %v404
        %v447 = vunpack.c.l.bf16 %v405
        %v448 = vunpack.c.h.bf16 %v404
        %v449 = vunpack.c.h.bf16 %v405
        %451 = vset.pattern.permute.xlu0 0
        %452 = vperm.xlu0 %451, %v426
        %v453 = vpop.permute.xlu0 %452
        %456 = vset.pattern.permute.xlu0 0
        %457 = vperm.xlu0 %456, %v427
        %v458 = vpop.permute.xlu0 %457
        %461 = vset.pattern.permute.xlu0 0
        %462 = vperm.xlu0 %461, %v428
        %v463 = vpop.permute.xlu0 %462
        %466 = vset.pattern.permute.xlu0 0
        %467 = vperm.xlu0 %466, %v429
        %v468 = vpop.permute.xlu0 %467
        %v470 = vmul.f32 %v453, %v442
        %v471 = vmul.f32 %v453, %v443
        %v472 = vmul.f32 %v458, %v444
        %v473 = vmul.f32 %v458, %v445
        %v474 = vmul.f32 %v463, %v446
        %v475 = vmul.f32 %v463, %v447
        %v476 = vmul.f32 %v468, %v448
        %v477 = vmul.f32 %v468, %v449
        %v478 = vadd.f32 %v470, %v472
        %v479 = vadd.f32 %v478, %v474
        %v480 = vadd.f32 %v479, %v476
        %v481 = vrot.slane %v480, 4
        %v482 = vadd.f32 %v480, %v481
        %v483 = vrot.slane %v482, 2
        %v484 = vadd.f32 %v482, %v483
        %v485 = vrot.slane %v484, 1
        %v486 = vadd.f32 %v484, %v485
        %v487 = vadd.f32 %v471, %v473
        %v488 = vadd.f32 %v487, %v475
        %v489 = vadd.f32 %v488, %v477
        %v490 = vrot.slane %v489, 4
        %v491 = vadd.f32 %v489, %v490
        %v492 = vrot.slane %v491, 2
        %v493 = vadd.f32 %v491, %v492
        %v494 = vrot.slane %v493, 1
        %v495 = vadd.f32 %v493, %v494
        %497 = vset.pattern.permute.xlu0 0
        %498 = vperm.xlu0 %497, %v408
        %v499 = vpop.permute.xlu0 %498
        %v501 = vadd.f32 %v486, %v499
        %v502 = vadd.f32 %v495, %v499
        %v505 = vcombine.low %v501, %v502
        %v507 = vunpack.c.l.s4 1966171168
        %v508 = vunpack.c.0.s8 %v507
        %v509 = vlaneseq
        %v510 = vshrl.u32 %v509, 7
        %v511 = vsub.s32 %v508, %v510
        %v512 = vrot.slane %v505, %v511
        %v514 = vunpack.c.l.s4 1966171168
        %v515 = vunpack.c.0.s8 %v514
        %v516 = vlaneseq
        %v517 = vshrl.u32 %v516, 7
        %v518 = vsub.s32 %v515, %v517
        %v519 = vrot.slane %v512, %v518
        %v521 = vlaneseq
        %vm522 = vcmp.ge.s32.totalorder %v521, 0
        %vm523 = vcmp.lt.s32.totalorder %v521, 256
        %vm524 = vmand %vm522, %vm523
        %525 = vst.msk [vmem:[%s137] sm:$0x3] %vm524, %v519
        %s526 = sand.u32 %s71, 1
        %s527 = scalar_lea.sflag [#allocation3], %s526
        %s528 = sand.u32 %s71, 1
        %s529 = smul.addr %s528, 2
        %s530 = scalar_lea.vmem [#allocation2], %s529
        // Predicated region
        $region29: #{_lambda_.1} parent=27 // pred_check
          %p531 = pneg %p81
        $region30: #{_lambda_.1} parent=27 // pred_check_branch
          %533 = sbr.rel (%p531) target = $region32
        $region31: #{_lambda_.1} parent=27 // pred_region
          %s534 = smul.u32 2, %s16
          %s536 = ssub.s32 32, 32
          %537 = vsyncadd %s527, %s536
          %s538 = smul.addr %s534, 16
          %s539 = scalar_lea.hbm %s2, %s538
          %s541 = sshll.u32 %s530, 4
          %s542 = int_to_ptr.vmem [resolvable:$true] %s541
          %544 = dma.vmem_to_hbm [thread:$0]  %s542, 32, %s539, %s527
        $region32: #{_lambda_.1} parent=27 // pred_fallthru
          _
      $region28: #{_lambda_.1} parent=5 // pred_fallthru
        _
      %p545 = scmp.le.s32.totalorder 2, %s11
      // Predicated region
      $region33: #{_lambda_.1} parent=5 // pred_check
        %p546 = pneg %p545
      $region34: #{_lambda_.1} parent=5 // pred_check_branch
        %548 = sbr.rel (%p546) target = $region36
      $region35: #{_lambda_.1} parent=5 // pred_region
        %s549 = ssub.s32 %s11, 2
        // Predicated region
        $region37: #{_lambda_.1} parent=35 // pred_check
          %p550 = pneg %p87
        $region38: #{_lambda_.1} parent=35 // pred_check_branch
          %552 = sbr.rel (%p550) target = $region40
        $region39: #{_lambda_.1} parent=35 // pred_region
          %s553 = sand.u32 %s72, 1
          %s554 = scalar_lea.sflag [#allocation3], %s553
          %s555 = sand.u32 %s72, 1
          %s556 = smul.addr %s555, 2
          %s557 = scalar_lea.vmem [#allocation2], %s556
          %558 = dma.done %s554, 32
        $region40: #{_lambda_.1} parent=35 // pred_fallthru
          _
      $region36: #{_lambda_.1} parent=5 // pred_fallthru
        _
    $region6: #{_lambda_.1} parent=1 // loop_footer
      %s15 = sadd.s32 1, %s11
    $region7: #{_lambda_.1} parent=1 // loop_footer_branch
      %10 = sbr.rel target = $region3
    $region8: #{_lambda_.1} parent=1 // loop_exit
      _
    %559 = vsyncpa [#allocation3], 1
    %s560 = scalar_lea.sflag [#allocation3], 1
    %561 = vsyncpa %s560, 1

</llo_original>
